<compile_context>
chip_gen: v5e
topology: v5e:2x2
jax: 0.10.0
libtpu: 0.0.40
codegen_flags: <defaults>
</compile_context>

<pallas_src>
import functools

import jax
import jax.numpy as jnp
import numpy as np
from jax.experimental import pallas as pl
from jax.experimental.pallas import tpu as pltpu


def _round_up(x, m):
    return ((x + m - 1) // m) * m


def dann_kernel(x_ref, w_ref, b_ref, gate_ref, swf_ref, pb_ref, pn_ref, sb_ref,
                out_ref):
    # (1) fused branch linears for all neurons/branches + ReLU (MXU, f32 acc)
    h = jnp.dot(x_ref[...], w_ref[...], preferred_element_type=jnp.float32)
    h = jnp.maximum(h + b_ref[...], 0.0)                       # (TB, F) f32
    # (2) fold the dense per-neuron soma weights elementwise (VPU)
    t = h * swf_ref[...]                                       # (TB, F)
    # (3) per-branch partial soma sums via 0/1 pooling matmul -> (TB, N*Br)
    q = jnp.dot(t, pb_ref[...], preferred_element_type=jnp.float32)
    # (4) gating at branch granularity (no (B, F) gate expansion anywhere)
    q = q * gate_ref[...]
    # (5) sum branches per neuron + soma bias -> (TB, N)
    out = jnp.dot(q, pn_ref[...], preferred_element_type=jnp.float32)
    out = out + sb_ref[...]
    # NOTE: last dim (n_neurons) is < 128 lanes -> masked stores; acceptable at
    # these sizes (pad/pack output lanes if n_neurons grows).
    out_ref[...] = out.astype(out_ref.dtype)


def dann_layer_forward(x, w_branch, b_branch, gate_values, soma_w, soma_b,
                       n_neurons, n_branches, branch_size,
                       *, compute_dtype=jnp.float32, batch_tile=128):
    """x: (B, D); w_branch: (D, F); b_branch: (F,);
    gate_values: (B, N*Br) or None; soma_w: (N, Br*S); soma_b: (N,).
    Returns (B, N) float32, matching DANNLayer.forward."""
    batch, d = x.shape
    F = n_neurons * n_branches * branch_size
    nbr = n_neurons * n_branches

    # --- batch tiling: pad B to a multiple of the tile so blocks divide evenly
    tb = min(batch_tile, _round_up(batch, 8))
    b_pad = _round_up(batch, tb)

    if gate_values is None:
        gate_values = jnp.ones((batch, nbr), dtype=jnp.float32)

    if b_pad != batch:
        x = jnp.pad(x, ((0, b_pad - batch), (0, 0)))
        gate_values = jnp.pad(gate_values, ((0, b_pad - batch), (0, 0)))

    # --- big MXU streams optionally in bf16 (halves HBM traffic on v6e/v7x);
    #     accumulation stays f32 via preferred_element_type.
    x_c = x.astype(compute_dtype)
    w_c = w_branch.astype(compute_dtype)

    # --- small f32 side tensors (elementwise path kept f32: v5e has no bf16 VPU)
    b_2d = b_branch.reshape(1, F).astype(jnp.float32)
    swf = soma_w.reshape(1, F).astype(jnp.float32)   # neuron-major, matches W column order
    sb_2d = soma_b.reshape(1, n_neurons).astype(jnp.float32)
    gate_f32 = gate_values.astype(jnp.float32)

    # --- 0/1 pooling matrices, built with jnp (jittable), DMA'd once, VMEM-resident
    pool_branch = (jnp.arange(F)[:, None] // branch_size
                   == jnp.arange(nbr)[None, :]).astype(jnp.float32)        # (F, N*Br)
    pool_neuron = (jnp.arange(nbr)[:, None] // n_branches
                   == jnp.arange(n_neurons)[None, :]).astype(jnp.float32)  # (N*Br, N)

    grid = (b_pad // tb,)
    out = pl.pallas_call(
        dann_kernel,
        out_shape=jax.ShapeDtypeStruct((b_pad, n_neurons), jnp.float32),
        grid_spec=pltpu.PrefetchScalarGridSpec(
            num_scalar_prefetch=0,
            grid=grid,
            in_specs=[
                pl.BlockSpec((tb, d), lambda i: (i, 0)),            # x: batch-tiled
                pl.BlockSpec((d, F), lambda i: (0, 0)),             # W: resident
                pl.BlockSpec((1, F), lambda i: (0, 0)),             # branch bias
                pl.BlockSpec((tb, nbr), lambda i: (i, 0)),          # gate: batch-tiled
                pl.BlockSpec((1, F), lambda i: (0, 0)),             # soma weights (dense)
                pl.BlockSpec((F, nbr), lambda i: (0, 0)),           # branch pooling (0/1)
                pl.BlockSpec((nbr, n_neurons), lambda i: (0, 0)),   # neuron pooling (0/1)
                pl.BlockSpec((1, n_neurons), lambda i: (0, 0)),     # soma bias
            ],
            out_specs=pl.BlockSpec((tb, n_neurons), lambda i: (i, 0)),
        ),
        compiler_params=pltpu.CompilerParams(
            dimension_semantics=("parallel",)),
    )(x_c, w_c, b_2d, gate_f32, swf, pool_branch, pool_neuron, sb_2d)
    return out[:batch]


def dann_layer_reference(x, w_branch, b_branch, gate_values, soma_w, soma_b,
                         n_neurons, n_branches, branch_size):
    """Pure-JAX reference mirroring the PyTorch module semantics."""
    batch = x.shape[0]
    per_neuron = n_branches * branch_size
    h = jnp.maximum(x @ w_branch + b_branch, 0.0)  # (B, F)
    h = h.reshape(batch, n_neurons, n_branches, branch_size)
    if gate_values is not None:
        g = gate_values.reshape(batch, n_neurons, n_branches, 1)
        h = h * g
    h = h.reshape(batch, n_neurons, per_neuron)
    out = jnp.einsum('bnf,nf->bn', h, soma_w) + soma_b[None, :]
    return out


if __name__ == "__main__":
    # small shapes consistent with the module (batch large enough to exercise
    # the batch-tiled grid: 256 rows, tile 128 -> grid=(2,))
    batch = 256
    input_size = 32
    n_neurons = 4
    n_branches = 3
    branch_size = 16
    F = n_neurons * n_branches * branch_size  # 192

    key = jax.random.PRNGKey(0)
    k_x, k_w, k_b, k_g, k_sw, k_sb = jax.random.split(key, 6)

    x = jax.random.normal(k_x, (batch, input_size), dtype=jnp.float32)
    # deterministic synthetic parameters (PyTorch weight layout transposed)
    w_branch = jax.random.normal(k_w, (input_size, F), dtype=jnp.float32) * 0.1
    b_branch = jax.random.normal(k_b, (F,), dtype=jnp.float32) * 0.1
    soma_w = jax.random.normal(k_sw, (n_neurons, n_branches * branch_size),
                               dtype=jnp.float32) * 0.1
    soma_b = jax.random.normal(k_sb, (n_neurons,), dtype=jnp.float32) * 0.1
    # gate_values as passed to DANNLayer.forward: (batch, n_neurons * n_branches)
    gate_values = jax.random.uniform(k_g, (batch, n_neurons * n_branches),
                                     dtype=jnp.float32)

    # --- f32 path (exact module semantics), jitted wrapper (no numpy packing)
    fwd = jax.jit(functools.partial(
        dann_layer_forward,
        n_neurons=n_neurons, n_branches=n_branches, branch_size=branch_size))
    out_f32 = jax.block_until_ready(
        fwd(x, w_branch, b_branch, gate_values, soma_w, soma_b))

    ref = jax.block_until_ready(
        dann_layer_reference(x, w_branch, b_branch, gate_values, soma_w, soma_b,
                             n_neurons, n_branches, branch_size))
    np.testing.assert_allclose(np.asarray(out_f32), np.asarray(ref),
                               rtol=1e-5, atol=1e-5)

    # --- bf16 MXU-input path (v6e/v7x optimization), f32 accumulation.
    # Compare against a reference that rounds the same inputs to bf16.
    out_bf16 = jax.block_until_ready(
        dann_layer_forward(x, w_branch, b_branch, gate_values, soma_w, soma_b,
                           n_neurons, n_branches, branch_size,
                           compute_dtype=jnp.bfloat16))
    ref_bf16 = dann_layer_reference(
        x.astype(jnp.bfloat16).astype(jnp.float32),
        w_branch.astype(jnp.bfloat16).astype(jnp.float32),
        b_branch, gate_values, soma_w, soma_b,
        n_neurons, n_branches, branch_size)
    np.testing.assert_allclose(np.asarray(out_bf16), np.asarray(ref_bf16),
                               rtol=1e-3, atol=1e-3)

    print("KERNEL_OK")
</pallas_src>

<mosaic_0001>
module attributes {stable_mosaic.version = 11 : i64} {
  func.func @dann_kernel(%arg0: i32, %arg1: memref<128x32xf32, #tpu.memory_space<vmem>>, %arg2: memref<32x192xf32, #tpu.memory_space<vmem>>, %arg3: memref<1x192xf32, #tpu.memory_space<vmem>>, %arg4: memref<128x12xf32, #tpu.memory_space<vmem>>, %arg5: memref<1x192xf32, #tpu.memory_space<vmem>>, %arg6: memref<192x12xf32, #tpu.memory_space<vmem>>, %arg7: memref<12x4xf32, #tpu.memory_space<vmem>>, %arg8: memref<1x4xf32, #tpu.memory_space<vmem>>, %arg9: memref<128x4xf32, #tpu.memory_space<vmem>>) attributes {dimension_semantics = [#tpu.dimension_semantics<parallel>], iteration_bounds = array<i64: 2>, scalar_prefetch = 0 : i64, scratch_operands = 0 : i64, tpu.core_type = #tpu.core_type<tc>, window_params = [{transform_indices = @transform_0, window_bounds = array<i64: 128, 32>}, {pipeline_mode = #tpu.pipeline_mode<synchronous>, transform_indices = @transform_1, window_bounds = array<i64: 32, 192>}, {pipeline_mode = #tpu.pipeline_mode<synchronous>, transform_indices = @transform_2, window_bounds = array<i64: 1, 192>}, {transform_indices = @transform_3, window_bounds = array<i64: 128, 12>}, {pipeline_mode = #tpu.pipeline_mode<synchronous>, transform_indices = @transform_4, window_bounds = array<i64: 1, 192>}, {pipeline_mode = #tpu.pipeline_mode<synchronous>, transform_indices = @transform_5, window_bounds = array<i64: 192, 12>}, {pipeline_mode = #tpu.pipeline_mode<synchronous>, transform_indices = @transform_6, window_bounds = array<i64: 12, 4>}, {pipeline_mode = #tpu.pipeline_mode<synchronous>, transform_indices = @transform_7, window_bounds = array<i64: 1, 4>}, {transform_indices = @transform_8, window_bounds = array<i64: 128, 4>}]} {
    %c0 = arith.constant 0 : index
    %c0_0 = arith.constant 0 : index
    %0 = vector.load %arg1[%c0, %c0_0] : memref<128x32xf32, #tpu.memory_space<vmem>>, vector<128x32xf32>
    %c0_1 = arith.constant 0 : index
    %c0_2 = arith.constant 0 : index
    %1 = vector.load %arg2[%c0_1, %c0_2] : memref<32x192xf32, #tpu.memory_space<vmem>>, vector<32x192xf32>
    %cst = arith.constant dense<0.000000e+00> : vector<128x192xf32>
    %2 = tpu.matmul %0, %1, %cst {dimension_numbers = #tpu.dot_dimension_numbers<[1], [0], [0], [1], [0, 0, 1, 1], [], []>} : vector<128x32xf32>, vector<32x192xf32>, vector<128x192xf32> -> vector<128x192xf32>
    %c0_3 = arith.constant 0 : index
    %c0_4 = arith.constant 0 : index
    %3 = vector.load %arg3[%c0_3, %c0_4] : memref<1x192xf32, #tpu.memory_space<vmem>>, vector<1x192xf32>
    %4 = vector.broadcast %3 : vector<1x192xf32> to vector<128x192xf32>
    %5 = arith.addf %2, %4 : vector<128x192xf32>
    %cst_5 = arith.constant 0.000000e+00 : f32
    %6 = vector.broadcast %cst_5 : f32 to vector<128x192xf32>
    %7 = arith.maximumf %5, %6 : vector<128x192xf32>
    %c0_6 = arith.constant 0 : index
    %c0_7 = arith.constant 0 : index
    %8 = vector.load %arg5[%c0_6, %c0_7] : memref<1x192xf32, #tpu.memory_space<vmem>>, vector<1x192xf32>
    %9 = vector.broadcast %8 : vector<1x192xf32> to vector<128x192xf32>
    %10 = arith.mulf %7, %9 : vector<128x192xf32>
    %c0_8 = arith.constant 0 : index
    %c0_9 = arith.constant 0 : index
    %11 = vector.load %arg6[%c0_8, %c0_9] : memref<192x12xf32, #tpu.memory_space<vmem>>, vector<192x12xf32>
    %cst_10 = arith.constant dense<0.000000e+00> : vector<128x12xf32>
    %12 = tpu.matmul %10, %11, %cst_10 {dimension_numbers = #tpu.dot_dimension_numbers<[1], [0], [0], [1], [0, 0, 1, 1], [], []>} : vector<128x192xf32>, vector<192x12xf32>, vector<128x12xf32> -> vector<128x12xf32>
    %c0_11 = arith.constant 0 : index
    %c0_12 = arith.constant 0 : index
    %13 = vector.load %arg4[%c0_11, %c0_12] : memref<128x12xf32, #tpu.memory_space<vmem>>, vector<128x12xf32>
    %14 = arith.mulf %12, %13 : vector<128x12xf32>
    %c0_13 = arith.constant 0 : index
    %c0_14 = arith.constant 0 : index
    %15 = vector.load %arg7[%c0_13, %c0_14] : memref<12x4xf32, #tpu.memory_space<vmem>>, vector<12x4xf32>
    %cst_15 = arith.constant dense<0.000000e+00> : vector<128x4xf32>
    %16 = tpu.matmul %14, %15, %cst_15 {dimension_numbers = #tpu.dot_dimension_numbers<[1], [0], [0], [1], [0, 0, 1, 1], [], []>} : vector<128x12xf32>, vector<12x4xf32>, vector<128x4xf32> -> vector<128x4xf32>
    %c0_16 = arith.constant 0 : index
    %c0_17 = arith.constant 0 : index
    %17 = vector.load %arg8[%c0_16, %c0_17] : memref<1x4xf32, #tpu.memory_space<vmem>>, vector<1x4xf32>
    %18 = vector.broadcast %17 : vector<1x4xf32> to vector<128x4xf32>
    %19 = arith.addf %16, %18 : vector<128x4xf32>
    %c0_18 = arith.constant 0 : index
    %c0_19 = arith.constant 0 : index
    %20 = vector.load %arg9[%c0_18, %c0_19] : memref<128x4xf32, #tpu.memory_space<vmem>>, vector<128x4xf32>
    tpu.vector_store %arg9[%c0_18, %c0_19], %19 {strides = array<i32>} : memref<128x4xf32, #tpu.memory_space<vmem>>, vector<128x4xf32>,
    return
  }
  func.func @transform_0(%arg0: i32) -> (i32, i32) {
    %c0_i32 = arith.constant 0 : i32
    %c0_i32_0 = arith.constant 0 : i32
    return %arg0, %c0_i32 : i32, i32
  }
  func.func @transform_1(%arg0: i32) -> (i32, i32) {
    %c0_i32 = arith.constant 0 : i32
    %c0_i32_0 = arith.constant 0 : i32
    %c0_i32_1 = arith.constant 0 : i32
    return %c0_i32, %c0_i32_0 : i32, i32
  }
  func.func @transform_2(%arg0: i32) -> (i32, i32) {
    %c0_i32 = arith.constant 0 : i32
    %c0_i32_0 = arith.constant 0 : i32
    %c0_i32_1 = arith.constant 0 : i32
    return %c0_i32, %c0_i32_0 : i32, i32
  }
  func.func @transform_3(%arg0: i32) -> (i32, i32) {
    %c0_i32 = arith.constant 0 : i32
    %c0_i32_0 = arith.constant 0 : i32
    return %arg0, %c0_i32 : i32, i32
  }
  func.func @transform_4(%arg0: i32) -> (i32, i32) {
    %c0_i32 = arith.constant 0 : i32
    %c0_i32_0 = arith.constant 0 : i32
    %c0_i32_1 = arith.constant 0 : i32
    return %c0_i32, %c0_i32_0 : i32, i32
  }
  func.func @transform_5(%arg0: i32) -> (i32, i32) {
    %c0_i32 = arith.constant 0 : i32
    %c0_i32_0 = arith.constant 0 : i32
    %c0_i32_1 = arith.constant 0 : i32
    return %c0_i32, %c0_i32_0 : i32, i32
  }
  func.func @transform_6(%arg0: i32) -> (i32, i32) {
    %c0_i32 = arith.constant 0 : i32
    %c0_i32_0 = arith.constant 0 : i32
    %c0_i32_1 = arith.constant 0 : i32
    return %c0_i32, %c0_i32_0 : i32, i32
  }
  func.func @transform_7(%arg0: i32) -> (i32, i32) {
    %c0_i32 = arith.constant 0 : i32
    %c0_i32_0 = arith.constant 0 : i32
    %c0_i32_1 = arith.constant 0 : i32
    return %c0_i32, %c0_i32_0 : i32, i32
  }
  func.func @transform_8(%arg0: i32) -> (i32, i32) {
    %c0_i32 = arith.constant 0 : i32
    %c0_i32_0 = arith.constant 0 : i32
    return %arg0, %c0_i32 : i32, i32
  }
}

</mosaic_0001>

<llo_original>
// kernel: dann_layer_forward.1
$region0: #{dann_layer_forward.1}
  #allocation0 [shape = 'u32[]', space=smem, size = 0x4, offset = 0x4, fixed_abs, tag = 'smem constant byte address 0x4 - core index']
  #allocation1 [shape = 'u32[72,128]{1,0:T(1,128)}', space=vmem, size = 0x9000, scoped, tag = 'internal scratch']
  %s0 = inlined_call_operand.vmem [shape: f32[256,32], index: 0, kind: input, shape index: {}]
  %s1 = inlined_call_operand.vmem [shape: f32[32,192], index: 1, kind: input, shape index: {}]
  %s2 = inlined_call_operand.vmem [shape: f32[1,192], index: 2, kind: input, shape index: {}]
  %s3 = inlined_call_operand.vmem [shape: f32[256,12], index: 3, kind: input, shape index: {}]
  %s4 = inlined_call_operand.vmem [shape: f32[1,192], index: 4, kind: input, shape index: {}]
  %s5 = inlined_call_operand.vmem [shape: f32[192,12], index: 5, kind: input, shape index: {}]
  %s6 = inlined_call_operand.vmem [shape: f32[12,4], index: 6, kind: input, shape index: {}]
  %s7 = inlined_call_operand.vmem [shape: f32[1,4], index: 7, kind: input, shape index: {}]
  %s8 = inlined_call_operand.vmem [shape: f32[256,4], index: 8, kind: output, shape index: {}]
  %s9 = sld [smem:[#allocation0]]
  $region65: #{dann_layer_forward.1} parent=0
    _
  %s11 = ssub.s32 1, %s9
  %s12 = scalar_select 0, %s11, %s9
  loop: start=0, step=1, limit=4
  $region2: #{dann_layer_forward.1} parent=0 // loop_pre_header
    _
  $region3: #{dann_layer_forward.1} parent=0 // loop_header
    %s14 = sphi 0, %s18
    %p15 = scmp.ge.s32.totalorder %s14, 4
    %s24 = sphi 0, %s26
    %s27 = sphi 0, %s24
    %s28 = sphi 0, %s27
    %s44 = sphi 0, %s28
    %s48 = sphi 0, %s48
    %s50 = sphi 0, %s48
    %s51 = sphi 0, %s50
    %s65 = sphi 0, %s51
    %s69 = sphi 0, %s69
    %s71 = sphi 0, %s69
    %s72 = sphi 0, %s71
    %s86 = sphi 0, %s72
    %s92 = sphi 0, %s94
    %s95 = sphi 0, %s92
    %s96 = sphi 0, %s95
    %s112 = sphi 0, %s96
    %s116 = sphi 0, %s116
    %s118 = sphi 0, %s116
    %s119 = sphi 0, %s118
    %s133 = sphi 0, %s119
    %s137 = sphi 0, %s137
    %s139 = sphi 0, %s137
    %s140 = sphi 0, %s139
    %s154 = sphi 0, %s140
    %s158 = sphi 0, %s158
    %s160 = sphi 0, %s158
    %s161 = sphi 0, %s160
    %s175 = sphi 0, %s161
    %s179 = sphi 0, %s179
    %s181 = sphi 0, %s179
    %s182 = sphi 0, %s181
    %s196 = sphi 0, %s182
    %s202 = sphi 0, %s204
    %s205 = sphi 0, %s202
    %s206 = sphi 0, %s205
    %s222 = sphi 0, %s206
  $region4: #{dann_layer_forward.1} parent=0 // loop_header_branch
    %17 = sbr.rel (%p15) target = $region8
  $region5: #{dann_layer_forward.1} parent=0 // loop_body
    %s19 = ssub.s32 %s14, 1
    %s20 = ssub.s32 %s14, 2
    %s21 = sadd.s32 %s14, 1
    %s22 = ssub.s32 %s14, %s21
    %p23 = scmp.eq.s32.totalorder %s22, 0
    %s25 = sadd.s32 %s24, 1
    %s26 = scalar_select %p23, %s24, %s25
    %p29 = pneg %p23
    %p30 = scmp.eq.s32.totalorder %s14, 1
    %p31 = por %p29, %p30
    %p32 = scmp.ne.s32.totalorder %s24, %s27
    %p33 = scmp.eq.s32.totalorder %s14, 0
    %p34 = por %p32, %p33
    %p35 = scmp.ne.s32.totalorder %s24, %s27
    %p36 = scmp.eq.s32.totalorder %s19, 1
    %p37 = por %p35, %p36
    %p38 = scmp.ne.s32.totalorder %s27, %s28
    %p39 = scmp.eq.s32.totalorder %s19, 0
    %p40 = por %p38, %p39
    %p41 = scmp.ne.s32.totalorder %s27, %s28
    %p42 = scmp.eq.s32.totalorder %s20, 1
    %p43 = por %p41, %p42
    %p45 = scmp.ne.s32.totalorder %s28, %s44
    %p46 = scmp.eq.s32.totalorder %s20, 0
    %p47 = por %p45, %p46
    %s49 = sadd.s32 %s48, 1
    %p52 = scmp.eq.s32.totalorder %s14, 1
    %p53 = scmp.ne.s32.totalorder %s48, %s50
    %p54 = scmp.eq.s32.totalorder %s14, 0
    %p55 = por %p53, %p54
    %p56 = scmp.ne.s32.totalorder %s48, %s50
    %p57 = scmp.eq.s32.totalorder %s19, 1
    %p58 = por %p56, %p57
    %p59 = scmp.ne.s32.totalorder %s50, %s51
    %p60 = scmp.eq.s32.totalorder %s19, 0
    %p61 = por %p59, %p60
    %p62 = scmp.ne.s32.totalorder %s50, %s51
    %p63 = scmp.eq.s32.totalorder %s20, 1
    %p64 = por %p62, %p63
    %p66 = scmp.ne.s32.totalorder %s51, %s65
    %p67 = scmp.eq.s32.totalorder %s20, 0
    %p68 = por %p66, %p67
    %s70 = sadd.s32 %s69, 1
    %p73 = scmp.eq.s32.totalorder %s14, 1
    %p74 = scmp.ne.s32.totalorder %s69, %s71
    %p75 = scmp.eq.s32.totalorder %s14, 0
    %p76 = por %p74, %p75
    %p77 = scmp.ne.s32.totalorder %s69, %s71
    %p78 = scmp.eq.s32.totalorder %s19, 1
    %p79 = por %p77, %p78
    %p80 = scmp.ne.s32.totalorder %s71, %s72
    %p81 = scmp.eq.s32.totalorder %s19, 0
    %p82 = por %p80, %p81
    %p83 = scmp.ne.s32.totalorder %s71, %s72
    %p84 = scmp.eq.s32.totalorder %s20, 1
    %p85 = por %p83, %p84
    %p87 = scmp.ne.s32.totalorder %s72, %s86
    %p88 = scmp.eq.s32.totalorder %s20, 0
    %p89 = por %p87, %p88
    %s90 = ssub.s32 %s14, %s21
    %p91 = scmp.eq.s32.totalorder %s90, 0
    %s93 = sadd.s32 %s92, 1
    %s94 = scalar_select %p91, %s92, %s93
    %p97 = pneg %p91
    %p98 = scmp.eq.s32.totalorder %s14, 1
    %p99 = por %p97, %p98
    %p100 = scmp.ne.s32.totalorder %s92, %s95
    %p101 = scmp.eq.s32.totalorder %s14, 0
    %p102 = por %p100, %p101
    %p103 = scmp.ne.s32.totalorder %s92, %s95
    %p104 = scmp.eq.s32.totalorder %s19, 1
    %p105 = por %p103, %p104
    %p106 = scmp.ne.s32.totalorder %s95, %s96
    %p107 = scmp.eq.s32.totalorder %s19, 0
    %p108 = por %p106, %p107
    %p109 = scmp.ne.s32.totalorder %s95, %s96
    %p110 = scmp.eq.s32.totalorder %s20, 1
    %p111 = por %p109, %p110
    %p113 = scmp.ne.s32.totalorder %s96, %s112
    %p114 = scmp.eq.s32.totalorder %s20, 0
    %p115 = por %p113, %p114
    %s117 = sadd.s32 %s116, 1
    %p120 = scmp.eq.s32.totalorder %s14, 1
    %p121 = scmp.ne.s32.totalorder %s116, %s118
    %p122 = scmp.eq.s32.totalorder %s14, 0
    %p123 = por %p121, %p122
    %p124 = scmp.ne.s32.totalorder %s116, %s118
    %p125 = scmp.eq.s32.totalorder %s19, 1
    %p126 = por %p124, %p125
    %p127 = scmp.ne.s32.totalorder %s118, %s119
    %p128 = scmp.eq.s32.totalorder %s19, 0
    %p129 = por %p127, %p128
    %p130 = scmp.ne.s32.totalorder %s118, %s119
    %p131 = scmp.eq.s32.totalorder %s20, 1
    %p132 = por %p130, %p131
    %p134 = scmp.ne.s32.totalorder %s119, %s133
    %p135 = scmp.eq.s32.totalorder %s20, 0
    %p136 = por %p134, %p135
    %s138 = sadd.s32 %s137, 1
    %p141 = scmp.eq.s32.totalorder %s14, 1
    %p142 = scmp.ne.s32.totalorder %s137, %s139
    %p143 = scmp.eq.s32.totalorder %s14, 0
    %p144 = por %p142, %p143
    %p145 = scmp.ne.s32.totalorder %s137, %s139
    %p146 = scmp.eq.s32.totalorder %s19, 1
    %p147 = por %p145, %p146
    %p148 = scmp.ne.s32.totalorder %s139, %s140
    %p149 = scmp.eq.s32.totalorder %s19, 0
    %p150 = por %p148, %p149
    %p151 = scmp.ne.s32.totalorder %s139, %s140
    %p152 = scmp.eq.s32.totalorder %s20, 1
    %p153 = por %p151, %p152
    %p155 = scmp.ne.s32.totalorder %s140, %s154
    %p156 = scmp.eq.s32.totalorder %s20, 0
    %p157 = por %p155, %p156
    %s159 = sadd.s32 %s158, 1
    %p162 = scmp.eq.s32.totalorder %s14, 1
    %p163 = scmp.ne.s32.totalorder %s158, %s160
    %p164 = scmp.eq.s32.totalorder %s14, 0
    %p165 = por %p163, %p164
    %p166 = scmp.ne.s32.totalorder %s158, %s160
    %p167 = scmp.eq.s32.totalorder %s19, 1
    %p168 = por %p166, %p167
    %p169 = scmp.ne.s32.totalorder %s160, %s161
    %p170 = scmp.eq.s32.totalorder %s19, 0
    %p171 = por %p169, %p170
    %p172 = scmp.ne.s32.totalorder %s160, %s161
    %p173 = scmp.eq.s32.totalorder %s20, 1
    %p174 = por %p172, %p173
    %p176 = scmp.ne.s32.totalorder %s161, %s175
    %p177 = scmp.eq.s32.totalorder %s20, 0
    %p178 = por %p176, %p177
    %s180 = sadd.s32 %s179, 1
    %p183 = scmp.eq.s32.totalorder %s14, 1
    %p184 = scmp.ne.s32.totalorder %s179, %s181
    %p185 = scmp.eq.s32.totalorder %s14, 0
    %p186 = por %p184, %p185
    %p187 = scmp.ne.s32.totalorder %s179, %s181
    %p188 = scmp.eq.s32.totalorder %s19, 1
    %p189 = por %p187, %p188
    %p190 = scmp.ne.s32.totalorder %s181, %s182
    %p191 = scmp.eq.s32.totalorder %s19, 0
    %p192 = por %p190, %p191
    %p193 = scmp.ne.s32.totalorder %s181, %s182
    %p194 = scmp.eq.s32.totalorder %s20, 1
    %p195 = por %p193, %p194
    %p197 = scmp.ne.s32.totalorder %s182, %s196
    %p198 = scmp.eq.s32.totalorder %s20, 0
    %p199 = por %p197, %p198
    %s200 = ssub.s32 %s14, %s21
    %p201 = scmp.eq.s32.totalorder %s200, 0
    %s203 = sadd.s32 %s202, 1
    %s204 = scalar_select %p201, %s202, %s203
    %p207 = pneg %p201
    %p208 = scmp.eq.s32.totalorder %s14, 1
    %p209 = por %p207, %p208
    %p210 = scmp.ne.s32.totalorder %s202, %s205
    %p211 = scmp.eq.s32.totalorder %s14, 0
    %p212 = por %p210, %p211
    %p213 = scmp.ne.s32.totalorder %s202, %s205
    %p214 = scmp.eq.s32.totalorder %s19, 1
    %p215 = por %p213, %p214
    %p216 = scmp.ne.s32.totalorder %s205, %s206
    %p217 = scmp.eq.s32.totalorder %s19, 0
    %p218 = por %p216, %p217
    %p219 = scmp.ne.s32.totalorder %s205, %s206
    %p220 = scmp.eq.s32.totalorder %s20, 1
    %p221 = por %p219, %p220
    %p223 = scmp.ne.s32.totalorder %s206, %s222
    %p224 = scmp.eq.s32.totalorder %s20, 0
    %p225 = por %p223, %p224
    %p226 = scmp.le.s32.totalorder 1, %s14
    %p227 = scmp.lt.s32.totalorder %s14, 3
    %p228 = pnand %p226, %p227
    %p229 = pneg %p228
    // Predicated region
    $region9: #{dann_layer_forward.1} parent=5 // pred_check
      _
    $region10: #{dann_layer_forward.1} parent=5 // pred_check_branch
      %231 = sbr.rel (%p228) target = $region12
    $region11: #{dann_layer_forward.1} parent=5 // pred_region
      %s232 = ssub.s32 %s14, 1
      // Predicated region
      $region13: #{dann_layer_forward.1} parent=11 // pred_check
        %p233 = pneg %p61
      $region14: #{dann_layer_forward.1} parent=11 // pred_check_branch
        %235 = sbr.rel (%p233) target = $region16
      $region15: #{dann_layer_forward.1} parent=11 // pred_region
        _
      $region16: #{dann_layer_forward.1} parent=11 // pred_fallthru
        _
      // Predicated region
      $region17: #{dann_layer_forward.1} parent=11 // pred_check
        %p236 = pneg %p82
      $region18: #{dann_layer_forward.1} parent=11 // pred_check_branch
        %238 = sbr.rel (%p236) target = $region20
      $region19: #{dann_layer_forward.1} parent=11 // pred_region
        _
      $region20: #{dann_layer_forward.1} parent=11 // pred_fallthru
        _
      // Predicated region
      $region21: #{dann_layer_forward.1} parent=11 // pred_check
        %p239 = pneg %p129
      $region22: #{dann_layer_forward.1} parent=11 // pred_check_branch
        %241 = sbr.rel (%p239) target = $region24
      $region23: #{dann_layer_forward.1} parent=11 // pred_region
        _
      $region24: #{dann_layer_forward.1} parent=11 // pred_fallthru
        _
      // Predicated region
      $region25: #{dann_layer_forward.1} parent=11 // pred_check
        %p242 = pneg %p150
      $region26: #{dann_layer_forward.1} parent=11 // pred_check_branch
        %244 = sbr.rel (%p242) target = $region28
      $region27: #{dann_layer_forward.1} parent=11 // pred_region
        _
      $region28: #{dann_layer_forward.1} parent=11 // pred_fallthru
        _
      // Predicated region
      $region29: #{dann_layer_forward.1} parent=11 // pred_check
        %p245 = pneg %p171
      $region30: #{dann_layer_forward.1} parent=11 // pred_check_branch
        %247 = sbr.rel (%p245) target = $region32
      $region31: #{dann_layer_forward.1} parent=11 // pred_region
        _
      $region32: #{dann_layer_forward.1} parent=11 // pred_fallthru
        _
      // Predicated region
      $region33: #{dann_layer_forward.1} parent=11 // pred_check
        %p248 = pneg %p192
      $region34: #{dann_layer_forward.1} parent=11 // pred_check_branch
        %250 = sbr.rel (%p248) target = $region36
      $region35: #{dann_layer_forward.1} parent=11 // pred_region
        _
      $region36: #{dann_layer_forward.1} parent=11 // pred_fallthru
        _
    $region12: #{dann_layer_forward.1} parent=5 // pred_fallthru
      _
    %p251 = scmp.lt.s32.totalorder %s14, 2
    // Predicated region
    $region37: #{dann_layer_forward.1} parent=5 // pred_check
      %p252 = pneg %p251
    $region38: #{dann_layer_forward.1} parent=5 // pred_check_branch
      %254 = sbr.rel (%p252) target = $region40
    $region39: #{dann_layer_forward.1} parent=5 // pred_region
      // Predicated region
      $region41: #{dann_layer_forward.1} parent=39 // pred_check
        %p255 = pneg %p34
      $region42: #{dann_layer_forward.1} parent=39 // pred_check_branch
        %257 = sbr.rel (%p255) target = $region44
      $region43: #{dann_layer_forward.1} parent=39 // pred_region
        %s258 = smul.u32 16, %s14
        %p259 = scmp.lt.s32.totalorder %s258, 31
        %s260 = scalar_select %p259, %s258, 31
        %s261 = smul.addr %s260, 8
        %s262 = scalar_lea.vmem %s0, %s261
        %s263 = smul.u32 16, %s14
      $region44: #{dann_layer_forward.1} parent=39 // pred_fallthru
        _
      // Predicated region
      $region45: #{dann_layer_forward.1} parent=39 // pred_check
        %p264 = pneg %p102
      $region46: #{dann_layer_forward.1} parent=39 // pred_check_branch
        %266 = sbr.rel (%p264) target = $region48
      $region47: #{dann_layer_forward.1} parent=39 // pred_region
        %s267 = smul.u32 16, %s14
        %p268 = scmp.lt.s32.totalorder %s267, 31
        %s269 = scalar_select %p268, %s267, 31
        %s270 = smul.addr %s269, 8
        %s271 = scalar_lea.vmem %s3, %s270
        %s272 = smul.u32 16, %s14
      $region48: #{dann_layer_forward.1} parent=39 // pred_fallthru
        _
    $region40: #{dann_layer_forward.1} parent=5 // pred_fallthru
      _
    %p273 = scmp.le.s32.totalorder 1, %s14
    %p274 = scmp.lt.s32.totalorder %s14, 3
    %p275 = pnand %p273, %p274
    %p276 = pneg %p275
    // Predicated region
    $region49: #{dann_layer_forward.1} parent=5 // pred_check
      _
    $region50: #{dann_layer_forward.1} parent=5 // pred_check_branch
      %278 = sbr.rel (%p275) target = $region52
    $region51: #{dann_layer_forward.1} parent=5 // pred_region
      %s279 = ssub.s32 %s14, 1
      %s280 = smul.u32 16, %s19
      %p281 = scmp.lt.s32.totalorder %s280, 31
      %s282 = scalar_select %p281, %s280, 31
      %s283 = smul.addr %s282, 8
      %s284 = scalar_lea.vmem %s0, %s283
      %p285 = pneg %p40
      %p286 = pneg %p37
      %p287 = pneg %p61
      %p288 = pneg %p58
      %p289 = pneg %p82
      %p290 = pneg %p79
      %s291 = smul.u32 16, %s19
      %p292 = scmp.lt.s32.totalorder %s291, 31
      %s293 = scalar_select %p292, %s291, 31
      %s294 = smul.addr %s293, 8
      %s295 = scalar_lea.vmem %s3, %s294
      %p296 = pneg %p108
      %p297 = pneg %p105
      %p298 = pneg %p129
      %p299 = pneg %p126
      %p300 = pneg %p150
      %p301 = pneg %p147
      %p302 = pneg %p171
      %p303 = pneg %p168
      %p304 = pneg %p192
      %p305 = pneg %p189
      %p306 = pneg %p218
      %p307 = pneg %p215
      %s308 = smul.u32 16, %s19
      %p309 = scmp.lt.s32.totalorder %s308, 31
      %s310 = scalar_select %p309, %s308, 31
      %s311 = smul.addr %s310, 8
      %s312 = scalar_lea.vmem %s8, %s311
      %s313 = smul.u32 16, %s19
      %p314 = scmp.lt.s32.totalorder %s313, 31
      %s315 = scalar_select %p314, %s313, 31
      %s316 = smul.addr %s315, 8
      %s317 = scalar_lea.vmem %s0, %s316
      %s318 = smul.u32 16, %s19
      %s319 = smul.u32 16, %s19
      %p320 = scmp.lt.s32.totalorder %s319, 31
      %s321 = scalar_select %p320, %s319, 31
      %s322 = smul.addr %s321, 8
      %s323 = scalar_lea.vmem %s3, %s322
      %s324 = smul.u32 16, %s19
      %s325 = smul.u32 16, %s19
      %p326 = scmp.lt.s32.totalorder %s325, 31
      %s327 = scalar_select %p326, %s325, 31
      %s328 = smul.addr %s327, 8
      %s329 = scalar_lea.vmem %s8, %s328
      %s330 = smul.u32 16, %s19
      %v331 = vld [vmem:[%s317] sm:$0xff]
      %v332 = vld [vmem:[%s317 + $0x8] sm:$0xff]
      %v333 = vld [vmem:[%s317 + $0x10] sm:$0xff]
      %v334 = vld [vmem:[%s317 + $0x18] sm:$0xff]
      %v335 = vld [vmem:[%s317 + $0x20] sm:$0xff]
      %v336 = vld [vmem:[%s317 + $0x28] sm:$0xff]
      %v337 = vld [vmem:[%s317 + $0x30] sm:$0xff]
      %v338 = vld [vmem:[%s317 + $0x38] sm:$0xff]
      %v339 = vld [vmem:[%s317 + $0x40] sm:$0xff]
      %v340 = vld [vmem:[%s317 + $0x48] sm:$0xff]
      %v341 = vld [vmem:[%s317 + $0x50] sm:$0xff]
      %v342 = vld [vmem:[%s317 + $0x58] sm:$0xff]
      %v343 = vld [vmem:[%s317 + $0x60] sm:$0xff]
      %v344 = vld [vmem:[%s317 + $0x68] sm:$0xff]
      %v345 = vld [vmem:[%s317 + $0x70] sm:$0xff]
      %v346 = vld [vmem:[%s317 + $0x78] sm:$0xff]
      %v347 = vld [vmem:[%s1] sm:$0xff]
      %v348 = vld [vmem:[%s1 + $0x8] sm:$0xff]
      %v349 = vld [vmem:[%s1 + $0x10] sm:$0xff]
      %v350 = vld [vmem:[%s1 + $0x18] sm:$0xff]
      %v351 = vld [vmem:[%s1 + $0x20] sm:$0xff]
      %v352 = vld [vmem:[%s1 + $0x28] sm:$0xff]
      %v353 = vld [vmem:[%s1 + $0x30] sm:$0xff]
      %v354 = vld [vmem:[%s1 + $0x38] sm:$0xff]
      %v355 = vld [vmem:[%s2] sm:$0x3]
      %v357 = vperm.slane %v355, 0
      %v358 = vperm.slane %v355, 1
      %vm361 = vcmask 261120
      %v363 = vsel %vm361, %v331, 0
      %v366 = vsel %vm361, %v332, 0
      %v369 = vsel %vm361, %v333, 0
      %v372 = vsel %vm361, %v334, 0
      %v375 = vsel %vm361, %v335, 0
      %v378 = vsel %vm361, %v336, 0
      %v381 = vsel %vm361, %v337, 0
      %v384 = vsel %vm361, %v338, 0
      %v387 = vsel %vm361, %v339, 0
      %v390 = vsel %vm361, %v340, 0
      %v393 = vsel %vm361, %v341, 0
      %v396 = vsel %vm361, %v342, 0
      %v399 = vsel %vm361, %v343, 0
      %v402 = vsel %vm361, %v344, 0
      %v405 = vsel %vm361, %v345, 0
      %v408 = vsel %vm361, %v346, 0
      %410 = vmatpush.msra.mxu0 0.0
      %411 = vmatpush.msra.mxu0 0.0
      %412 = vmatpush.msra.mxu0 0.0
      %413 = vmatpush.msra.mxu0 0.0
      %414 = vmatpush.msra.mxu0 0.0
      %415 = vmatpush.msra.mxu0 0.0
      %416 = vmatpush.msra.mxu0 0.0
      %417 = vmatpush.msra.mxu0 0.0
      %418 = vmatpush.msra.mxu0 0.0
      %419 = vmatpush.msra.mxu0 0.0
      %420 = vmatpush.msra.mxu0 0.0
      %421 = vmatpush.msra.mxu0 0.0
      %422 = vmatpush.msra.mxu0 %v353
      %423 = vmatpush.msra.mxu0 %v351
      %424 = vmatpush.msra.mxu0 %v349
      %425 = vmatpush.msra.mxu0 %v347
      %426 = vmatmul.f32.gmra.mxu0 %v363
      %v427 = vpop.f32.mrf.mxu0
      %v428 = vadd.f32 %v357, %v427
      %429 = vmatmul.f32.gmra.mxu0 %v366
      %v430 = vpop.f32.mrf.mxu0
      %v431 = vadd.f32 %v357, %v430
      %432 = vmatmul.f32.gmra.mxu0 %v369
      %v433 = vpop.f32.mrf.mxu0
      %v434 = vadd.f32 %v357, %v433
      %435 = vmatmul.f32.gmra.mxu0 %v372
      %v436 = vpop.f32.mrf.mxu0
      %v437 = vadd.f32 %v357, %v436
      %438 = vmatmul.f32.gmra.mxu0 %v375
      %v439 = vpop.f32.mrf.mxu0
      %v440 = vadd.f32 %v357, %v439
      %441 = vmatmul.f32.gmra.mxu0 %v378
      %v442 = vpop.f32.mrf.mxu0
      %v443 = vadd.f32 %v357, %v442
      %444 = vmatmul.f32.gmra.mxu0 %v381
      %v445 = vpop.f32.mrf.mxu0
      %v446 = vadd.f32 %v357, %v445
      %447 = vmatmul.f32.gmra.mxu0 %v384
      %v448 = vpop.f32.mrf.mxu0
      %v449 = vadd.f32 %v357, %v448
      %450 = vmatmul.f32.gmra.mxu0 %v387
      %v451 = vpop.f32.mrf.mxu0
      %v452 = vadd.f32 %v357, %v451
      %453 = vmatmul.f32.gmra.mxu0 %v390
      %v454 = vpop.f32.mrf.mxu0
      %v455 = vadd.f32 %v357, %v454
      %456 = vmatmul.f32.gmra.mxu0 %v393
      %v457 = vpop.f32.mrf.mxu0
      %v458 = vadd.f32 %v357, %v457
      %459 = vmatmul.f32.gmra.mxu0 %v396
      %v460 = vpop.f32.mrf.mxu0
      %v461 = vadd.f32 %v357, %v460
      %462 = vmatmul.f32.gmra.mxu0 %v399
      %v463 = vpop.f32.mrf.mxu0
      %v464 = vadd.f32 %v357, %v463
      %465 = vmatmul.f32.gmra.mxu0 %v402
      %v466 = vpop.f32.mrf.mxu0
      %v467 = vadd.f32 %v357, %v466
      %468 = vmatmul.f32.gmra.mxu0 %v405
      %v469 = vpop.f32.mrf.mxu0
      %v470 = vadd.f32 %v357, %v469
      %471 = vmatmul.f32.gmra.mxu0 %v408
      %v472 = vpop.f32.mrf.mxu0
      %v473 = vadd.f32 %v357, %v472
      %474 = vdwg.mxu0
      %475 = vmatpush.msra.mxu0 0.0
      %476 = vmatpush.msra.mxu0 0.0
      %477 = vmatpush.msra.mxu0 0.0
      %478 = vmatpush.msra.mxu0 0.0
      %479 = vmatpush.msra.mxu0 0.0
      %480 = vmatpush.msra.mxu0 0.0
      %481 = vmatpush.msra.mxu0 0.0
      %482 = vmatpush.msra.mxu0 0.0
      %483 = vmatpush.msra.mxu0 0.0
      %484 = vmatpush.msra.mxu0 0.0
      %485 = vmatpush.msra.mxu0 0.0
      %486 = vmatpush.msra.mxu0 0.0
      %487 = vmatpush.msra.mxu0 %v354
      %488 = vmatpush.msra.mxu0 %v352
      %489 = vmatpush.msra.mxu0 %v350
      %490 = vmatpush.msra.mxu0 %v348
      %491 = vmatmul.f32.gmra.mxu0 %v363
      %v492 = vpop.f32.mrf.mxu0
      %v493 = vadd.f32 %v358, %v492
      %494 = vmatmul.f32.gmra.mxu0 %v366
      %v495 = vpop.f32.mrf.mxu0
      %v496 = vadd.f32 %v358, %v495
      %497 = vmatmul.f32.gmra.mxu0 %v369
      %v498 = vpop.f32.mrf.mxu0
      %v499 = vadd.f32 %v358, %v498
      %500 = vmatmul.f32.gmra.mxu0 %v372
      %v501 = vpop.f32.mrf.mxu0
      %v502 = vadd.f32 %v358, %v501
      %503 = vmatmul.f32.gmra.mxu0 %v375
      %v504 = vpop.f32.mrf.mxu0
      %v505 = vadd.f32 %v358, %v504
      %506 = vmatmul.f32.gmra.mxu0 %v378
      %v507 = vpop.f32.mrf.mxu0
      %v508 = vadd.f32 %v358, %v507
      %509 = vmatmul.f32.gmra.mxu0 %v381
      %v510 = vpop.f32.mrf.mxu0
      %v511 = vadd.f32 %v358, %v510
      %512 = vmatmul.f32.gmra.mxu0 %v384
      %v513 = vpop.f32.mrf.mxu0
      %v514 = vadd.f32 %v358, %v513
      %515 = vmatmul.f32.gmra.mxu0 %v387
      %v516 = vpop.f32.mrf.mxu0
      %v517 = vadd.f32 %v358, %v516
      %518 = vmatmul.f32.gmra.mxu0 %v390
      %v519 = vpop.f32.mrf.mxu0
      %v520 = vadd.f32 %v358, %v519
      %521 = vmatmul.f32.gmra.mxu0 %v393
      %v522 = vpop.f32.mrf.mxu0
      %v523 = vadd.f32 %v358, %v522
      %524 = vmatmul.f32.gmra.mxu0 %v396
      %v525 = vpop.f32.mrf.mxu0
      %v526 = vadd.f32 %v358, %v525
      %527 = vmatmul.f32.gmra.mxu0 %v399
      %v528 = vpop.f32.mrf.mxu0
      %v529 = vadd.f32 %v358, %v528
      %530 = vmatmul.f32.gmra.mxu0 %v402
      %v531 = vpop.f32.mrf.mxu0
      %v532 = vadd.f32 %v358, %v531
      %533 = vmatmul.f32.gmra.mxu0 %v405
      %v534 = vpop.f32.mrf.mxu0
      %v535 = vadd.f32 %v358, %v534
      %536 = vmatmul.f32.gmra.mxu0 %v408
      %v537 = vpop.f32.mrf.mxu0
      %v538 = vadd.f32 %v358, %v537
      %539 = vdwg.mxu0
      %v540 = vmax.f32 %v428, 0.0
      %v541 = vmax.f32 %v493, 0.0
      %v542 = vmax.f32 %v431, 0.0
      %v543 = vmax.f32 %v496, 0.0
      %v544 = vmax.f32 %v434, 0.0
      %v545 = vmax.f32 %v499, 0.0
      %v546 = vmax.f32 %v437, 0.0
      %v547 = vmax.f32 %v502, 0.0
      %v548 = vmax.f32 %v440, 0.0
      %v549 = vmax.f32 %v505, 0.0
      %v550 = vmax.f32 %v443, 0.0
      %v551 = vmax.f32 %v508, 0.0
      %v552 = vmax.f32 %v446, 0.0
      %v553 = vmax.f32 %v511, 0.0
      %v554 = vmax.f32 %v449, 0.0
      %v555 = vmax.f32 %v514, 0.0
      %v556 = vmax.f32 %v452, 0.0
      %v557 = vmax.f32 %v517, 0.0
      %v558 = vmax.f32 %v455, 0.0
      %v559 = vmax.f32 %v520, 0.0
      %v560 = vmax.f32 %v458, 0.0
      %v561 = vmax.f32 %v523, 0.0
      %v562 = vmax.f32 %v461, 0.0
      %v563 = vmax.f32 %v526, 0.0
      %v564 = vmax.f32 %v464, 0.0
      %v565 = vmax.f32 %v529, 0.0
      %v566 = vmax.f32 %v467, 0.0
      %v567 = vmax.f32 %v532, 0.0
      %v568 = vmax.f32 %v470, 0.0
      %v569 = vmax.f32 %v535, 0.0
      %v570 = vmax.f32 %v473, 0.0
      %v571 = vmax.f32 %v538, 0.0
      %v572 = vld [vmem:[%s4] sm:$0x3]
      %v574 = vperm.slane %v572, 0
      %v575 = vperm.slane %v572, 1
      %v578 = vmul.f32 %v540, %v574
      %v579 = vmul.f32 %v541, %v575
      %v580 = vmul.f32 %v542, %v574
      %v581 = vmul.f32 %v543, %v575
      %v582 = vmul.f32 %v544, %v574
      %v583 = vmul.f32 %v545, %v575
      %v584 = vmul.f32 %v546, %v574
      %v585 = vmul.f32 %v547, %v575
      %v586 = vmul.f32 %v548, %v574
      %v587 = vmul.f32 %v549, %v575
      %v588 = vmul.f32 %v550, %v574
      %v589 = vmul.f32 %v551, %v575
      %v590 = vmul.f32 %v552, %v574
      %v591 = vmul.f32 %v553, %v575
      %v592 = vmul.f32 %v554, %v574
      %v593 = vmul.f32 %v555, %v575
      %v594 = vmul.f32 %v556, %v574
      %v595 = vmul.f32 %v557, %v575
      %v596 = vmul.f32 %v558, %v574
      %v597 = vmul.f32 %v559, %v575
      %v598 = vmul.f32 %v560, %v574
      %v599 = vmul.f32 %v561, %v575
      %v600 = vmul.f32 %v562, %v574
      %v601 = vmul.f32 %v563, %v575
      %v602 = vmul.f32 %v564, %v574
      %v603 = vmul.f32 %v565, %v575
      %v604 = vmul.f32 %v566, %v574
      %v605 = vmul.f32 %v567, %v575
      %v606 = vmul.f32 %v568, %v574
      %v607 = vmul.f32 %v569, %v575
      %v608 = vmul.f32 %v570, %v574
      %v609 = vmul.f32 %v571, %v575
      %v610 = vld [vmem:[%s5] sm:$0xff]
      %v611 = vld [vmem:[%s5 + $0x8] sm:$0xff]
      %v612 = vld [vmem:[%s5 + $0x10] sm:$0xff]
      %v613 = vld [vmem:[%s5 + $0x18] sm:$0xff]
      %v614 = vld [vmem:[%s5 + $0x20] sm:$0xff]
      %v615 = vld [vmem:[%s5 + $0x28] sm:$0xff]
      %v616 = vld [vmem:[%s5 + $0x30] sm:$0xff]
      %v617 = vld [vmem:[%s5 + $0x38] sm:$0xff]
      %v618 = vld [vmem:[%s5 + $0x40] sm:$0xff]
      %v619 = vld [vmem:[%s5 + $0x48] sm:$0xff]
      %v620 = vld [vmem:[%s5 + $0x50] sm:$0xff]
      %v621 = vld [vmem:[%s5 + $0x58] sm:$0xff]
      %v622 = vld [vmem:[%s5 + $0x60] sm:$0xff]
      %v623 = vld [vmem:[%s5 + $0x68] sm:$0xff]
      %v624 = vld [vmem:[%s5 + $0x70] sm:$0xff]
      %v625 = vld [vmem:[%s5 + $0x78] sm:$0xff]
      %v626 = vld [vmem:[%s5 + $0x80] sm:$0xff]
      %v627 = vld [vmem:[%s5 + $0x88] sm:$0xff]
      %v628 = vld [vmem:[%s5 + $0x90] sm:$0xff]
      %v629 = vld [vmem:[%s5 + $0x98] sm:$0xff]
      %v630 = vld [vmem:[%s5 + $0xa0] sm:$0xff]
      %v631 = vld [vmem:[%s5 + $0xa8] sm:$0xff]
      %v632 = vld [vmem:[%s5 + $0xb0] sm:$0xff]
      %v633 = vld [vmem:[%s5 + $0xb8] sm:$0xff]
      %vm634 = vcmask 523264
      %v636 = vsel %vm634, %v579, 0
      %v639 = vsel %vm634, %v581, 0
      %v642 = vsel %vm634, %v583, 0
      %v645 = vsel %vm634, %v585, 0
      %v648 = vsel %vm634, %v587, 0
      %v651 = vsel %vm634, %v589, 0
      %v654 = vsel %vm634, %v591, 0
      %v657 = vsel %vm634, %v593, 0
      %v660 = vsel %vm634, %v595, 0
      %v663 = vsel %vm634, %v597, 0
      %v666 = vsel %vm634, %v599, 0
      %v669 = vsel %vm634, %v601, 0
      %v672 = vsel %vm634, %v603, 0
      %v675 = vsel %vm634, %v605, 0
      %v678 = vsel %vm634, %v607, 0
      %v681 = vsel %vm634, %v609, 0
      %683 = vmatpush.msra.mxu0 %v625
      %684 = vmatpush.msra.mxu0 %v624
      %685 = vmatpush.msra.mxu0 %v623
      %686 = vmatpush.msra.mxu0 %v622
      %687 = vmatpush.msra.mxu0 %v621
      %688 = vmatpush.msra.mxu0 %v620
      %689 = vmatpush.msra.mxu0 %v619
      %690 = vmatpush.msra.mxu0 %v618
      %691 = vmatpush.msra.mxu0 %v617
      %692 = vmatpush.msra.mxu0 %v616
      %693 = vmatpush.msra.mxu0 %v615
      %694 = vmatpush.msra.mxu0 %v614
      %695 = vmatpush.msra.mxu0 %v613
      %696 = vmatpush.msra.mxu0 %v612
      %697 = vmatpush.msra.mxu0 %v611
      %698 = vmatpush.msra.mxu0 %v610
      %699 = vmatmul.f32.gmra.mxu0 %v578
      %v700 = vpop.f32.mrf.mxu0
      %v701 = vadd.f32 0.0, %v700
      %702 = vmatmul.f32.gmra.mxu0 %v580
      %v703 = vpop.f32.mrf.mxu0
      %v704 = vadd.f32 0.0, %v703
      %705 = vmatmul.f32.gmra.mxu0 %v582
      %v706 = vpop.f32.mrf.mxu0
      %v707 = vadd.f32 0.0, %v706
      %708 = vmatmul.f32.gmra.mxu0 %v584
      %v709 = vpop.f32.mrf.mxu0
      %v710 = vadd.f32 0.0, %v709
      %711 = vmatmul.f32.gmra.mxu0 %v586
      %v712 = vpop.f32.mrf.mxu0
      %v713 = vadd.f32 0.0, %v712
      %714 = vmatmul.f32.gmra.mxu0 %v588
      %v715 = vpop.f32.mrf.mxu0
      %v716 = vadd.f32 0.0, %v715
      %717 = vmatmul.f32.gmra.mxu0 %v590
      %v718 = vpop.f32.mrf.mxu0
      %v719 = vadd.f32 0.0, %v718
      %720 = vmatmul.f32.gmra.mxu0 %v592
      %v721 = vpop.f32.mrf.mxu0
      %v722 = vadd.f32 0.0, %v721
      %723 = vmatmul.f32.gmra.mxu0 %v594
      %v724 = vpop.f32.mrf.mxu0
      %v725 = vadd.f32 0.0, %v724
      %726 = vmatmul.f32.gmra.mxu0 %v596
      %v727 = vpop.f32.mrf.mxu0
      %v728 = vadd.f32 0.0, %v727
      %729 = vmatmul.f32.gmra.mxu0 %v598
      %v730 = vpop.f32.mrf.mxu0
      %v731 = vadd.f32 0.0, %v730
      %732 = vmatmul.f32.gmra.mxu0 %v600
      %v733 = vpop.f32.mrf.mxu0
      %v734 = vadd.f32 0.0, %v733
      %735 = vmatmul.f32.gmra.mxu0 %v602
      %v736 = vpop.f32.mrf.mxu0
      %v737 = vadd.f32 0.0, %v736
      %738 = vmatmul.f32.gmra.mxu0 %v604
      %v739 = vpop.f32.mrf.mxu0
      %v740 = vadd.f32 0.0, %v739
      %741 = vmatmul.f32.gmra.mxu0 %v606
      %v742 = vpop.f32.mrf.mxu0
      %v743 = vadd.f32 0.0, %v742
      %744 = vmatmul.f32.gmra.mxu0 %v608
      %v745 = vpop.f32.mrf.mxu0
      %v746 = vadd.f32 0.0, %v745
      %747 = vdwg.mxu0
      %748 = vmatpush.msra.mxu0 0.0
      %749 = vmatpush.msra.mxu0 0.0
      %750 = vmatpush.msra.mxu0 0.0
      %751 = vmatpush.msra.mxu0 0.0
      %752 = vmatpush.msra.mxu0 0.0
      %753 = vmatpush.msra.mxu0 0.0
      %754 = vmatpush.msra.mxu0 0.0
      %755 = vmatpush.msra.mxu0 0.0
      %756 = vmatpush.msra.mxu0 %v633
      %757 = vmatpush.msra.mxu0 %v632
      %758 = vmatpush.msra.mxu0 %v631
      %759 = vmatpush.msra.mxu0 %v630
      %760 = vmatpush.msra.mxu0 %v629
      %761 = vmatpush.msra.mxu0 %v628
      %762 = vmatpush.msra.mxu0 %v627
      %763 = vmatpush.msra.mxu0 %v626
      %764 = vmatmul.f32.gmra.mxu0 %v636
      %v765 = vpop.f32.mrf.mxu0
      %v766 = vadd.f32 %v701, %v765
      %767 = vmatmul.f32.gmra.mxu0 %v639
      %v768 = vpop.f32.mrf.mxu0
      %v769 = vadd.f32 %v704, %v768
      %770 = vmatmul.f32.gmra.mxu0 %v642
      %v771 = vpop.f32.mrf.mxu0
      %v772 = vadd.f32 %v707, %v771
      %773 = vmatmul.f32.gmra.mxu0 %v645
      %v774 = vpop.f32.mrf.mxu0
      %v775 = vadd.f32 %v710, %v774
      %776 = vmatmul.f32.gmra.mxu0 %v648
      %v777 = vpop.f32.mrf.mxu0
      %v778 = vadd.f32 %v713, %v777
      %779 = vmatmul.f32.gmra.mxu0 %v651
      %v780 = vpop.f32.mrf.mxu0
      %v781 = vadd.f32 %v716, %v780
      %782 = vmatmul.f32.gmra.mxu0 %v654
      %v783 = vpop.f32.mrf.mxu0
      %v784 = vadd.f32 %v719, %v783
      %785 = vmatmul.f32.gmra.mxu0 %v657
      %v786 = vpop.f32.mrf.mxu0
      %v787 = vadd.f32 %v722, %v786
      %788 = vmatmul.f32.gmra.mxu0 %v660
      %v789 = vpop.f32.mrf.mxu0
      %v790 = vadd.f32 %v725, %v789
      %791 = vmatmul.f32.gmra.mxu0 %v663
      %v792 = vpop.f32.mrf.mxu0
      %v793 = vadd.f32 %v728, %v792
      %794 = vmatmul.f32.gmra.mxu0 %v666
      %v795 = vpop.f32.mrf.mxu0
      %v796 = vadd.f32 %v731, %v795
      %797 = vmatmul.f32.gmra.mxu0 %v669
      %v798 = vpop.f32.mrf.mxu0
      %v799 = vadd.f32 %v734, %v798
      %800 = vmatmul.f32.gmra.mxu0 %v672
      %v801 = vpop.f32.mrf.mxu0
      %v802 = vadd.f32 %v737, %v801
      %803 = vmatmul.f32.gmra.mxu0 %v675
      %v804 = vpop.f32.mrf.mxu0
      %v805 = vadd.f32 %v740, %v804
      %806 = vmatmul.f32.gmra.mxu0 %v678
      %v807 = vpop.f32.mrf.mxu0
      %v808 = vadd.f32 %v743, %v807
      %809 = vmatmul.f32.gmra.mxu0 %v681
      %v810 = vpop.f32.mrf.mxu0
      %v811 = vadd.f32 %v746, %v810
      %812 = vdwg.mxu0
      %v813 = vld [vmem:[%s323] sm:$0xff]
      %v814 = vld [vmem:[%s323 + $0x8] sm:$0xff]
      %v815 = vld [vmem:[%s323 + $0x10] sm:$0xff]
      %v816 = vld [vmem:[%s323 + $0x18] sm:$0xff]
      %v817 = vld [vmem:[%s323 + $0x20] sm:$0xff]
      %v818 = vld [vmem:[%s323 + $0x28] sm:$0xff]
      %v819 = vld [vmem:[%s323 + $0x30] sm:$0xff]
      %v820 = vld [vmem:[%s323 + $0x38] sm:$0xff]
      %v821 = vld [vmem:[%s323 + $0x40] sm:$0xff]
      %v822 = vld [vmem:[%s323 + $0x48] sm:$0xff]
      %v823 = vld [vmem:[%s323 + $0x50] sm:$0xff]
      %v824 = vld [vmem:[%s323 + $0x58] sm:$0xff]
      %v825 = vld [vmem:[%s323 + $0x60] sm:$0xff]
      %v826 = vld [vmem:[%s323 + $0x68] sm:$0xff]
      %v827 = vld [vmem:[%s323 + $0x70] sm:$0xff]
      %v828 = vld [vmem:[%s323 + $0x78] sm:$0xff]
      %v829 = vmul.f32 %v766, %v813
      %v830 = vmul.f32 %v769, %v814
      %v831 = vmul.f32 %v772, %v815
      %v832 = vmul.f32 %v775, %v816
      %v833 = vmul.f32 %v778, %v817
      %v834 = vmul.f32 %v781, %v818
      %v835 = vmul.f32 %v784, %v819
      %v836 = vmul.f32 %v787, %v820
      %v837 = vmul.f32 %v790, %v821
      %v838 = vmul.f32 %v793, %v822
      %v839 = vmul.f32 %v796, %v823
      %v840 = vmul.f32 %v799, %v824
      %v841 = vmul.f32 %v802, %v825
      %v842 = vmul.f32 %v805, %v826
      %v843 = vmul.f32 %v808, %v827
      %v844 = vmul.f32 %v811, %v828
      %v845 = vld [vmem:[%s6] sm:$0xff]
      %v846 = vld [vmem:[%s6 + $0x8] sm:$0xf]
      %v847 = vld [vmem:[%s7] sm:$0x1]
      %v849 = vperm.slane %v847, 0
      %vm851 = vcmask 97280
      %v853 = vsel %vm851, %v829, 0
      %v856 = vsel %vm851, %v830, 0
      %v859 = vsel %vm851, %v831, 0
      %v862 = vsel %vm851, %v832, 0
      %v865 = vsel %vm851, %v833, 0
      %v868 = vsel %vm851, %v834, 0
      %v871 = vsel %vm851, %v835, 0
      %v874 = vsel %vm851, %v836, 0
      %v877 = vsel %vm851, %v837, 0
      %v880 = vsel %vm851, %v838, 0
      %v883 = vsel %vm851, %v839, 0
      %v886 = vsel %vm851, %v840, 0
      %v889 = vsel %vm851, %v841, 0
      %v892 = vsel %vm851, %v842, 0
      %v895 = vsel %vm851, %v843, 0
      %v898 = vsel %vm851, %v844, 0
      %vm900 = vcmask 1043456
      %v902 = vsel %vm900, %v846, 0
      %904 = vmatpush.msra.mxu0 0.0
      %905 = vmatpush.msra.mxu0 0.0
      %906 = vmatpush.msra.mxu0 0.0
      %907 = vmatpush.msra.mxu0 0.0
      %908 = vmatpush.msra.mxu0 0.0
      %909 = vmatpush.msra.mxu0 0.0
      %910 = vmatpush.msra.mxu0 0.0
      %911 = vmatpush.msra.mxu0 0.0
      %912 = vmatpush.msra.mxu0 0.0
      %913 = vmatpush.msra.mxu0 0.0
      %914 = vmatpush.msra.mxu0 0.0
      %915 = vmatpush.msra.mxu0 0.0
      %916 = vmatpush.msra.mxu0 0.0
      %917 = vmatpush.msra.mxu0 0.0
      %918 = vmatpush.msra.mxu0 %v902
      %919 = vmatpush.msra.mxu0 %v845
      %920 = vmatmul.f32.gmra.mxu0 %v853
      %v921 = vpop.f32.mrf.mxu0
      %v922 = vadd.f32 %v849, %v921
      %923 = vmatmul.f32.gmra.mxu0 %v856
      %v924 = vpop.f32.mrf.mxu0
      %v925 = vadd.f32 %v849, %v924
      %926 = vmatmul.f32.gmra.mxu0 %v859
      %v927 = vpop.f32.mrf.mxu0
      %v928 = vadd.f32 %v849, %v927
      %929 = vmatmul.f32.gmra.mxu0 %v862
      %v930 = vpop.f32.mrf.mxu0
      %v931 = vadd.f32 %v849, %v930
      %932 = vmatmul.f32.gmra.mxu0 %v865
      %v933 = vpop.f32.mrf.mxu0
      %v934 = vadd.f32 %v849, %v933
      %935 = vmatmul.f32.gmra.mxu0 %v868
      %v936 = vpop.f32.mrf.mxu0
      %v937 = vadd.f32 %v849, %v936
      %938 = vmatmul.f32.gmra.mxu0 %v871
      %v939 = vpop.f32.mrf.mxu0
      %v940 = vadd.f32 %v849, %v939
      %941 = vmatmul.f32.gmra.mxu0 %v874
      %v942 = vpop.f32.mrf.mxu0
      %v943 = vadd.f32 %v849, %v942
      %944 = vmatmul.f32.gmra.mxu0 %v877
      %v945 = vpop.f32.mrf.mxu0
      %v946 = vadd.f32 %v849, %v945
      %947 = vmatmul.f32.gmra.mxu0 %v880
      %v948 = vpop.f32.mrf.mxu0
      %v949 = vadd.f32 %v849, %v948
      %950 = vmatmul.f32.gmra.mxu0 %v883
      %v951 = vpop.f32.mrf.mxu0
      %v952 = vadd.f32 %v849, %v951
      %953 = vmatmul.f32.gmra.mxu0 %v886
      %v954 = vpop.f32.mrf.mxu0
      %v955 = vadd.f32 %v849, %v954
      %956 = vmatmul.f32.gmra.mxu0 %v889
      %v957 = vpop.f32.mrf.mxu0
      %v958 = vadd.f32 %v849, %v957
      %959 = vmatmul.f32.gmra.mxu0 %v892
      %v960 = vpop.f32.mrf.mxu0
      %v961 = vadd.f32 %v849, %v960
      %962 = vmatmul.f32.gmra.mxu0 %v895
      %v963 = vpop.f32.mrf.mxu0
      %v964 = vadd.f32 %v849, %v963
      %965 = vmatmul.f32.gmra.mxu0 %v898
      %v966 = vpop.f32.mrf.mxu0
      %v967 = vadd.f32 %v849, %v966
      %968 = vdwg.mxu0
      %vm969 = vcmask 31744
      %970 = vst.msk [vmem:[%s329] sm:$0xff] %vm969, %v922
      %971 = vst.msk [vmem:[%s329 + $0x8] sm:$0xff] %vm969, %v925
      %972 = vst.msk [vmem:[%s329 + $0x10] sm:$0xff] %vm969, %v928
      %973 = vst.msk [vmem:[%s329 + $0x18] sm:$0xff] %vm969, %v931
      %974 = vst.msk [vmem:[%s329 + $0x20] sm:$0xff] %vm969, %v934
      %975 = vst.msk [vmem:[%s329 + $0x28] sm:$0xff] %vm969, %v937
      %976 = vst.msk [vmem:[%s329 + $0x30] sm:$0xff] %vm969, %v940
      %977 = vst.msk [vmem:[%s329 + $0x38] sm:$0xff] %vm969, %v943
      %978 = vst.msk [vmem:[%s329 + $0x40] sm:$0xff] %vm969, %v946
      %979 = vst.msk [vmem:[%s329 + $0x48] sm:$0xff] %vm969, %v949
      %980 = vst.msk [vmem:[%s329 + $0x50] sm:$0xff] %vm969, %v952
      %981 = vst.msk [vmem:[%s329 + $0x58] sm:$0xff] %vm969, %v955
      %982 = vst.msk [vmem:[%s329 + $0x60] sm:$0xff] %vm969, %v958
      %983 = vst.msk [vmem:[%s329 + $0x68] sm:$0xff] %vm969, %v961
      %984 = vst.msk [vmem:[%s329 + $0x70] sm:$0xff] %vm969, %v964
      %985 = vst.msk [vmem:[%s329 + $0x78] sm:$0xff] %vm969, %v967
      %s986 = smul.u32 16, %s19
      %p987 = scmp.lt.s32.totalorder %s986, 31
      %s988 = scalar_select %p987, %s986, 31
      %s989 = smul.addr %s988, 8
      %s990 = scalar_lea.vmem %s8, %s989
      // Predicated region
      $region53: #{dann_layer_forward.1} parent=51 // pred_check
        %p991 = pneg %p215
      $region54: #{dann_layer_forward.1} parent=51 // pred_check_branch
        %993 = sbr.rel (%p991) target = $region56
      $region55: #{dann_layer_forward.1} parent=51 // pred_region
        %s994 = smul.u32 16, %s19
      $region56: #{dann_layer_forward.1} parent=51 // pred_fallthru
        _
    $region52: #{dann_layer_forward.1} parent=5 // pred_fallthru
      _
    %p995 = scmp.le.s32.totalorder 2, %s14
    // Predicated region
    $region57: #{dann_layer_forward.1} parent=5 // pred_check
      %p996 = pneg %p995
    $region58: #{dann_layer_forward.1} parent=5 // pred_check_branch
      %998 = sbr.rel (%p996) target = $region60
    $region59: #{dann_layer_forward.1} parent=5 // pred_region
      %s999 = ssub.s32 %s14, 2
      // Predicated region
      $region61: #{dann_layer_forward.1} parent=59 // pred_check
        %p1000 = pneg %p221
      $region62: #{dann_layer_forward.1} parent=59 // pred_check_branch
        %1002 = sbr.rel (%p1000) target = $region64
      $region63: #{dann_layer_forward.1} parent=59 // pred_region
        %s1003 = smul.u32 16, %s20
        %p1004 = scmp.lt.s32.totalorder %s1003, 31
        %s1005 = scalar_select %p1004, %s1003, 31
        %s1006 = smul.addr %s1005, 8
        %s1007 = scalar_lea.vmem %s8, %s1006
      $region64: #{dann_layer_forward.1} parent=59 // pred_fallthru
        _
    $region60: #{dann_layer_forward.1} parent=5 // pred_fallthru
      _
  $region6: #{dann_layer_forward.1} parent=0 // loop_footer
    %s18 = sadd.s32 1, %s14
  $region7: #{dann_layer_forward.1} parent=0 // loop_footer_branch
    %13 = sbr.rel target = $region3
  $region8: #{dann_layer_forward.1} parent=0 // loop_exit
    _

</llo_original>
